<compile_context>
chip_gen: v5e
topology: v5e:2x2
jax: 0.10.0
libtpu: 0.0.40
codegen_flags: <defaults>
</compile_context>

<pallas_src>
import functools
import math

import jax
import jax.numpy as jnp
from jax.experimental import pallas as pl
from jax.experimental.pallas import tpu as pltpu


def _tpu_vmem_bytes():
    """Physical VMEM per core; conservative (v7x = 64 MiB) if unknown."""
    try:
        info = pltpu.get_tpu_info()
        return int(getattr(info, "vmem_capacity_bytes", 64 * 2**20))
    except Exception:
        return 64 * 2**20


def _default_n_split():
    """2 only on multi-TensorCore parts (v7x); 1 on v5e/v6e."""
    try:
        info = pltpu.get_tpu_info()
        for name in ("num_tensorcores", "tensorcores_per_chip",
                     "num_cores", "core_count"):
            v = getattr(info, name, None)
            if v is not None:
                return 2 if int(v) > 1 else 1
    except Exception:
        pass
    return 1


def _label_smoothing_kernel(target_ref, logits_ref, loss_ref, count_ref,
                            loss_acc, count_acc,
                            *, conf, smooth, pad_idx, const_c):
    i = pl.program_id(1)

    @pl.when(i == 0)
    def _init():
        loss_acc[...] = jnp.zeros_like(loss_acc)
        count_acc[...] = jnp.zeros_like(count_acc)

    tgt = target_ref[...]                                   # (tm, 1) int32
    tm, V = logits_ref.shape

    # Read per-use with the upcast applied inside each expression so a full
    # (tm, V) f32 copy of a bf16 tile is never materialized in VMEM.
    def xf():
        return logits_ref[...].astype(jnp.float32)

    # Row-wise logsumexp (max-stabilized): two streamed sweeps.
    m = jnp.max(xf(), axis=-1, keepdims=True)               # (tm, 1)
    lse = jnp.log(jnp.sum(jnp.exp(xf() - m), axis=-1, keepdims=True)) + m

    # Row sum of x (for the smooth component of sum_col t*x).
    sum_x = jnp.sum(xf(), axis=-1, keepdims=True)           # (tm, 1)

    # x[row, tgt[row]]: one compare + select + row-reduce.
    col = jax.lax.broadcasted_iota(jnp.int32, (tm, V), 1)
    x_tgt = jnp.sum(jnp.where(col == tgt, xf(), jnp.float32(0.0)),
                    axis=-1, keepdims=True)                 # (tm, 1)

    # x[:, pad_idx]: static single-column slice (pad_idx is compile-time).
    x_pad = logits_ref[:, pad_idx:pad_idx + 1].astype(jnp.float32)  # (tm, 1)

    # sum_col t*x = smooth*Σx + (conf - smooth)*x[tgt] - smooth*x[:, pad_idx]
    # (valid for non-pad rows, i.e. tgt != pad_idx; pad rows are masked below)
    tx = (jnp.float32(smooth) * sum_x
          + jnp.float32(conf - smooth) * x_tgt
          - jnp.float32(smooth) * x_pad)

    # KL_row = C + lse - sum_col t*x  (since t sums to 1 per non-pad row)
    row_loss = jnp.float32(const_c) + lse - tx              # (tm, 1)
    nonpad = tgt != pad_idx
    loss_acc[...] += jnp.where(nonpad, row_loss, jnp.float32(0.0))
    count_acc[...] += nonpad.astype(jnp.int32)

    @pl.when(i == pl.num_programs(1) - 1)
    def _finalize():
        # Collapse the per-row accumulators only once, on the last step, and
        # broadcast the partial into the whole lane-dense output block; the
        # wrapper reads element [s*8, 0] of each split's block.
        loss_ref[...] = jnp.sum(loss_acc[...]) + jnp.zeros_like(loss_ref)
        count_ref[...] = jnp.sum(count_acc[...]) + jnp.zeros_like(count_ref)


def label_smoothing_loss(logits, target, *, size, label_smoothing, pad_idx,
                         tm=None, n_split=None):
    """Returns (loss, count) matching LabelSmoothingLoss.forward."""
    assert 0.0 < label_smoothing <= 1.0
    assert size > 2, "label smoothing needs size > 2 (size-2 denominator)"
    V = logits.shape[-1]
    assert V == size

    # Keep the source dtype in HBM (bf16 stays bf16); the kernel upcasts.
    x = logits.reshape(-1, V)
    tgt = target.reshape(-1, 1).astype(jnp.int32)
    N = x.shape[0]

    # --- generation-aware VMEM budget ------------------------------------
    phys_vmem = _tpu_vmem_bytes()          # 64 MiB v7x, 128 MiB v5e/v6e
    vmem_limit = int(min(40 * 2**20, max(16 * 2**20, phys_vmem - 24 * 2**20)))

    # Per-step working set per row: double-buffered logits in source dtype
    # plus ~two (tm, V) f32 temporaries (shifted exp operand / exp result).
    per_row_bytes = V * (2 * x.dtype.itemsize + 8)
    if tm is None:
        budget = min(16 * 2**20, vmem_limit // 2)
        tm = (budget // per_row_bytes) // 8 * 8
        tm = int(max(8, min(256, tm)))     # cap keeps (tm,1) row stats small
    tm = int(max(8, (tm // 8) * 8))
    tm = min(tm, max(8, -(-N // 8) * 8))   # don't over-pad tiny problems

    if n_split is None:
        n_split = _default_n_split()       # 2 only on multi-TC parts (v7x)
    n_tiles = -(-N // tm)
    n_split = int(max(1, min(n_split, n_tiles)))

    # Pad rows so N is a multiple of n_split*tm; padded rows carry
    # target=pad_idx and therefore contribute exactly 0 loss and 0 count.
    chunk = n_split * tm
    n_pad = (-N) % chunk
    if n_pad:
        x = jnp.concatenate([x, jnp.zeros((n_pad, V), x.dtype)], axis=0)
        tgt = jnp.concatenate(
            [tgt, jnp.full((n_pad, 1), pad_idx, jnp.int32)], axis=0)
    steps = (N + n_pad) // chunk

    # Compile-time constant C = conf*log(conf) + (V-2)*s*log(s).
    conf = 1.0 - float(label_smoothing)
    smooth = float(label_smoothing) / (size - 2)
    const_c = 0.0
    if conf > 0.0:
        const_c += conf * math.log(conf)
    if smooth > 0.0:
        const_c += (size - 2) * smooth * math.log(smooth)

    kernel = functools.partial(
        _label_smoothing_kernel, conf=conf, smooth=smooth,
        pad_idx=int(pad_idx), const_c=const_c)

    loss_parts, count_parts = pl.pallas_call(
        kernel,
        out_shape=(jax.ShapeDtypeStruct((n_split * 8, 128), jnp.float32),
                   jax.ShapeDtypeStruct((n_split * 8, 128), jnp.int32)),
        grid_spec=pltpu.PrefetchScalarGridSpec(
            num_scalar_prefetch=0,
            grid=(n_split, steps),
            in_specs=[pl.BlockSpec((tm, 1), lambda s, i: (s * steps + i, 0)),
                      pl.BlockSpec((tm, V), lambda s, i: (s * steps + i, 0))],
            out_specs=(pl.BlockSpec((8, 128), lambda s, i: (s, 0)),
                       pl.BlockSpec((8, 128), lambda s, i: (s, 0))),
            scratch_shapes=[pltpu.VMEM((tm, 1), jnp.float32),
                            pltpu.VMEM((tm, 1), jnp.int32)]),
        compiler_params=pltpu.CompilerParams(
            dimension_semantics=("parallel", "arbitrary"),
            vmem_limit_bytes=vmem_limit),
    )(tgt, x)

    loss = jnp.sum(loss_parts[::8, 0])
    count = jnp.sum(count_parts[::8, 0])
    return loss, count


def _reference(logits, target, *, size, label_smoothing, pad_idx):
    V = logits.shape[-1]
    logp = jax.nn.log_softmax(logits.astype(jnp.float32), axis=-1).reshape(-1, V)
    tgt = target.reshape(-1)
    n = tgt.shape[0]
    td = jnp.full((n, V), label_smoothing / (size - 2), dtype=jnp.float32)
    td = td.at[jnp.arange(n), tgt].set(1.0 - label_smoothing)
    td = td.at[:, pad_idx].set(0.0)
    td = jnp.where((tgt == pad_idx)[:, None], 0.0, td)
    safe = jnp.where(td > 0, td, 1.0)
    loss = jnp.sum(jnp.where(td > 0, td * (jnp.log(safe) - logp), 0.0))
    count = jnp.sum((tgt != pad_idx).astype(jnp.int32))
    return loss, count


if __name__ == "__main__":
    key = jax.random.PRNGKey(0)
    pad_idx = 0
    smoothing = 0.1

    tests = [
        ((2, 8, 32), jnp.float32, {}, 1e-4),                        # auto tiling
        ((2, 16, 32), jnp.float32, dict(tm=8, n_split=2), 1e-4),    # multi-step + split
        ((2, 8, 32), jnp.bfloat16, {}, 2e-3),                       # bf16 HBM path
    ]
    for (B, S, V), dtype, kwargs, tol in tests:
        k1, k2 = jax.random.split(jax.random.fold_in(key, B * S + V))
        logits = jax.random.normal(k1, (B, S, V), dtype=jnp.float32).astype(dtype)
        target = jax.random.randint(k2, (B, S), 0, V, dtype=jnp.int32)

        loss, count = label_smoothing_loss(
            logits, target, size=V, label_smoothing=smoothing,
            pad_idx=pad_idx, **kwargs)
        jax.block_until_ready((loss, count))

        ref_loss, ref_count = _reference(
            logits, target, size=V, label_smoothing=smoothing, pad_idx=pad_idx)
        assert jnp.allclose(loss, ref_loss, rtol=tol, atol=tol), (loss, ref_loss)
        assert int(count) == int(ref_count), (count, ref_count)

    print("KERNEL_OK")
</pallas_src>

<mosaic_0001>
module attributes {stable_mosaic.version = 11 : i64} {
  func.func @_label_smoothing_kernel(%arg0: i32, %arg1: i32, %arg2: memref<16x1xi32, #tpu.memory_space<vmem>>, %arg3: memref<16x32xf32, #tpu.memory_space<vmem>>, %arg4: memref<8x128xf32, #tpu.memory_space<vmem>>, %arg5: memref<8x128xi32, #tpu.memory_space<vmem>>, %arg6: memref<16x1xf32, #tpu.memory_space<vmem>>, %arg7: memref<16x1xi32, #tpu.memory_space<vmem>>) attributes {dimension_semantics = [#tpu.dimension_semantics<parallel>, #tpu.dimension_semantics<arbitrary>], iteration_bounds = array<i64: 1, 1>, scalar_prefetch = 0 : i64, scratch_operands = 2 : i64, tpu.core_type = #tpu.core_type<tc>, window_params = [{transform_indices = @transform_0, window_bounds = array<i64: 16, 1>}, {transform_indices = @transform_1, window_bounds = array<i64: 16, 32>}, {transform_indices = @transform_2, window_bounds = array<i64: 8, 128>}, {transform_indices = @transform_3, window_bounds = array<i64: 8, 128>}]} {
    %c0_i32 = arith.constant 0 : i32
    %0 = arith.cmpi eq, %arg1, %c0_i32 : i32
    %1 = arith.extui %0 : i1 to i32
    %c0_i32_0 = arith.constant 0 : i32
    %2 = arith.cmpi ne, %1, %c0_i32_0 : i32
    scf.if %2 {
      %cst_32 = arith.constant 0.000000e+00 : f32
      %52 = vector.broadcast %cst_32 : f32 to vector<16x1xf32>
      %c0_33 = arith.constant 0 : index
      %c0_34 = arith.constant 0 : index
      %53 = vector.load %arg6[%c0_33, %c0_34] : memref<16x1xf32, #tpu.memory_space<vmem>>, vector<16x1xf32>
      tpu.vector_store %arg6[%c0_33, %c0_34], %52 {strides = array<i32>} : memref<16x1xf32, #tpu.memory_space<vmem>>, vector<16x1xf32>,
      %c0_i32_35 = arith.constant 0 : i32
      %54 = vector.broadcast %c0_i32_35 : i32 to vector<16x1xi32>
      %c0_36 = arith.constant 0 : index
      %c0_37 = arith.constant 0 : index
      %55 = vector.load %arg7[%c0_36, %c0_37] : memref<16x1xi32, #tpu.memory_space<vmem>>, vector<16x1xi32>
      tpu.vector_store %arg7[%c0_36, %c0_37], %54 {strides = array<i32>} : memref<16x1xi32, #tpu.memory_space<vmem>>, vector<16x1xi32>,
    } else {
    }
    %c0 = arith.constant 0 : index
    %c0_1 = arith.constant 0 : index
    %3 = vector.load %arg2[%c0, %c0_1] : memref<16x1xi32, #tpu.memory_space<vmem>>, vector<16x1xi32>
    %c0_2 = arith.constant 0 : index
    %c0_3 = arith.constant 0 : index
    %4 = vector.load %arg3[%c0_2, %c0_3] : memref<16x32xf32, #tpu.memory_space<vmem>>, vector<16x32xf32>
    %cst = arith.constant dense<0xFF800000> : vector<16xf32>
    %5 = vector.multi_reduction <maximumf>, %4, %cst [1] : vector<16x32xf32> to vector<16xf32>
    %6 = vector.shape_cast %5 : vector<16xf32> to vector<16x1xf32>
    %c0_4 = arith.constant 0 : index
    %c0_5 = arith.constant 0 : index
    %7 = vector.load %arg3[%c0_4, %c0_5] : memref<16x32xf32, #tpu.memory_space<vmem>>, vector<16x32xf32>
    %8 = vector.broadcast %6 : vector<16x1xf32> to vector<16x32xf32>
    %9 = arith.subf %7, %8 : vector<16x32xf32>
    %10 = math.exp %9 : vector<16x32xf32>
    %cst_6 = arith.constant dense<0.000000e+00> : vector<16xf32>
    %11 = vector.multi_reduction <add>, %10, %cst_6 [1] : vector<16x32xf32> to vector<16xf32>
    %12 = vector.shape_cast %11 : vector<16xf32> to vector<16x1xf32>
    %13 = math.log %12 : vector<16x1xf32>
    %14 = arith.addf %13, %6 : vector<16x1xf32>
    %c0_7 = arith.constant 0 : index
    %c0_8 = arith.constant 0 : index
    %15 = vector.load %arg3[%c0_7, %c0_8] : memref<16x32xf32, #tpu.memory_space<vmem>>, vector<16x32xf32>
    %cst_9 = arith.constant dense<0.000000e+00> : vector<16xf32>
    %16 = vector.multi_reduction <add>, %15, %cst_9 [1] : vector<16x32xf32> to vector<16xf32>
    %17 = vector.shape_cast %16 : vector<16xf32> to vector<16x1xf32>
    %18 = tpu.iota {dimensions = array<i32: 1>} : vector<16x32xi32>
    %19 = vector.broadcast %3 : vector<16x1xi32> to vector<16x32xi32>
    %20 = arith.cmpi eq, %18, %19 : vector<16x32xi32>
    %c0_10 = arith.constant 0 : index
    %c0_11 = arith.constant 0 : index
    %21 = vector.load %arg3[%c0_10, %c0_11] : memref<16x32xf32, #tpu.memory_space<vmem>>, vector<16x32xf32>
    %cst_12 = arith.constant 0.000000e+00 : f32
    %22 = vector.broadcast %cst_12 : f32 to vector<16x32xf32>
    %23 = arith.select %20, %21, %22 : vector<16x32xi1>, vector<16x32xf32>
    %cst_13 = arith.constant dense<0.000000e+00> : vector<16xf32>
    %24 = vector.multi_reduction <add>, %23, %cst_13 [1] : vector<16x32xf32> to vector<16xf32>
    %25 = vector.shape_cast %24 : vector<16xf32> to vector<16x1xf32>
    %c0_14 = arith.constant 0 : index
    %c0_15 = arith.constant 0 : index
    %26 = vector.load %arg3[%c0_14, %c0_15] : memref<16x32xf32, #tpu.memory_space<vmem>>, vector<16x1xf32>
    %cst_16 = arith.constant 0.00333333341 : f32
    %27 = vector.broadcast %cst_16 : f32 to vector<16x1xf32>
    %28 = arith.mulf %27, %17 : vector<16x1xf32>
    %cst_17 = arith.constant 0.896666646 : f32
    %29 = vector.broadcast %cst_17 : f32 to vector<16x1xf32>
    %30 = arith.mulf %29, %25 : vector<16x1xf32>
    %31 = arith.addf %28, %30 : vector<16x1xf32>
    %cst_18 = arith.constant 0.00333333341 : f32
    %32 = vector.broadcast %cst_18 : f32 to vector<16x1xf32>
    %33 = arith.mulf %32, %26 : vector<16x1xf32>
    %34 = arith.subf %31, %33 : vector<16x1xf32>
    %cst_19 = arith.constant -0.665202737 : f32
    %35 = vector.broadcast %cst_19 : f32 to vector<16x1xf32>
    %36 = arith.addf %35, %14 : vector<16x1xf32>
    %37 = arith.subf %36, %34 : vector<16x1xf32>
    %c0_i32_20 = arith.constant 0 : i32
    %38 = vector.broadcast %c0_i32_20 : i32 to vector<16x1xi32>
    %39 = arith.cmpi ne, %3, %38 : vector<16x1xi32>
    %c0_21 = arith.constant 0 : index
    %c0_22 = arith.constant 0 : index
    %40 = vector.load %arg6[%c0_21, %c0_22] : memref<16x1xf32, #tpu.memory_space<vmem>>, vector<16x1xf32>
    %cst_23 = arith.constant 0.000000e+00 : f32
    %41 = vector.broadcast %cst_23 : f32 to vector<16x1xf32>
    %42 = arith.select %39, %37, %41 : vector<16x1xi1>, vector<16x1xf32>
    %43 = arith.addf %40, %42 : vector<16x1xf32>
    %c0_24 = arith.constant 0 : index
    %c0_25 = arith.constant 0 : index
    %44 = vector.load %arg6[%c0_24, %c0_25] : memref<16x1xf32, #tpu.memory_space<vmem>>, vector<16x1xf32>
    tpu.vector_store %arg6[%c0_24, %c0_25], %43 {strides = array<i32>} : memref<16x1xf32, #tpu.memory_space<vmem>>, vector<16x1xf32>,
    %c0_26 = arith.constant 0 : index
    %c0_27 = arith.constant 0 : index
    %45 = vector.load %arg7[%c0_26, %c0_27] : memref<16x1xi32, #tpu.memory_space<vmem>>, vector<16x1xi32>
    %46 = arith.extui %39 : vector<16x1xi1> to vector<16x1xi32>
    %47 = arith.addi %45, %46 : vector<16x1xi32>
    %c0_28 = arith.constant 0 : index
    %c0_29 = arith.constant 0 : index
    %48 = vector.load %arg7[%c0_28, %c0_29] : memref<16x1xi32, #tpu.memory_space<vmem>>, vector<16x1xi32>
    tpu.vector_store %arg7[%c0_28, %c0_29], %47 {strides = array<i32>} : memref<16x1xi32, #tpu.memory_space<vmem>>, vector<16x1xi32>,
    %c0_i32_30 = arith.constant 0 : i32
    %49 = arith.cmpi eq, %arg1, %c0_i32_30 : i32
    %50 = arith.extui %49 : i1 to i32
    %c0_i32_31 = arith.constant 0 : i32
    %51 = arith.cmpi ne, %50, %c0_i32_31 : i32
    scf.if %51 {
      %c0_32 = arith.constant 0 : index
      %c0_33 = arith.constant 0 : index
      %52 = vector.load %arg6[%c0_32, %c0_33] : memref<16x1xf32, #tpu.memory_space<vmem>>, vector<16x1xf32>
      %53 = vector.shape_cast %52 : vector<16x1xf32> to vector<1x16x1xf32>
      %cst_34 = arith.constant dense<0.000000e+00> : vector<1xf32>
      %54 = vector.multi_reduction <add>, %53, %cst_34 [1, 2] : vector<1x16x1xf32> to vector<1xf32>
      %55 = vector.shape_cast %54 : vector<1xf32> to vector<1x1x1xf32>
      %56 = vector.extract %55[0, 0, 0] : f32 from vector<1x1x1xf32>
      %cst_35 = arith.constant 0.000000e+00 : f32
      %57 = vector.broadcast %cst_35 : f32 to vector<8x128xf32>
      %58 = vector.broadcast %56 : f32 to vector<8x128xf32>
      %59 = arith.addf %58, %57 : vector<8x128xf32>
      %c0_36 = arith.constant 0 : index
      %c0_37 = arith.constant 0 : index
      %60 = vector.load %arg4[%c0_36, %c0_37] : memref<8x128xf32, #tpu.memory_space<vmem>>, vector<8x128xf32>
      tpu.vector_store %arg4[%c0_36, %c0_37], %59 {strides = array<i32>} : memref<8x128xf32, #tpu.memory_space<vmem>>, vector<8x128xf32>,
      %c0_38 = arith.constant 0 : index
      %c0_39 = arith.constant 0 : index
      %61 = vector.load %arg7[%c0_38, %c0_39] : memref<16x1xi32, #tpu.memory_space<vmem>>, vector<16x1xi32>
      %62 = vector.shape_cast %61 : vector<16x1xi32> to vector<1x16x1xi32>
      %cst_40 = arith.constant dense<0> : vector<1xi32>
      %63 = vector.multi_reduction <add>, %62, %cst_40 [1, 2] : vector<1x16x1xi32> to vector<1xi32>
      %64 = vector.shape_cast %63 : vector<1xi32> to vector<1x1x1xi32>
      %65 = vector.extract %64[0, 0, 0] : i32 from vector<1x1x1xi32>
      %c0_i32_41 = arith.constant 0 : i32
      %66 = vector.broadcast %c0_i32_41 : i32 to vector<8x128xi32>
      %67 = vector.broadcast %65 : i32 to vector<8x128xi32>
      %68 = arith.addi %67, %66 : vector<8x128xi32>
      %c0_42 = arith.constant 0 : index
      %c0_43 = arith.constant 0 : index
      %69 = vector.load %arg5[%c0_42, %c0_43] : memref<8x128xi32, #tpu.memory_space<vmem>>, vector<8x128xi32>
      tpu.vector_store %arg5[%c0_42, %c0_43], %68 {strides = array<i32>} : memref<8x128xi32, #tpu.memory_space<vmem>>, vector<8x128xi32>,
    } else {
    }
    return
  }
  func.func @transform_0(%arg0: i32, %arg1: i32) -> (i32, i32) {
    %c1_i32 = arith.constant 1 : i32
    %0 = arith.muli %arg0, %c1_i32 : i32
    %1 = arith.addi %0, %arg1 : i32
    %c0_i32 = arith.constant 0 : i32
    %c0_i32_0 = arith.constant 0 : i32
    return %1, %c0_i32 : i32, i32
  }
  func.func @transform_1(%arg0: i32, %arg1: i32) -> (i32, i32) {
    %c1_i32 = arith.constant 1 : i32
    %0 = arith.muli %arg0, %c1_i32 : i32
    %1 = arith.addi %0, %arg1 : i32
    %c0_i32 = arith.constant 0 : i32
    %c0_i32_0 = arith.constant 0 : i32
    return %1, %c0_i32 : i32, i32
  }
  func.func @transform_2(%arg0: i32, %arg1: i32) -> (i32, i32) {
    %c0_i32 = arith.constant 0 : i32
    %c0_i32_0 = arith.constant 0 : i32
    return %arg0, %c0_i32 : i32, i32
  }
  func.func @transform_3(%arg0: i32, %arg1: i32) -> (i32, i32) {
    %c0_i32 = arith.constant 0 : i32
    %c0_i32_0 = arith.constant 0 : i32
    return %arg0, %c0_i32 : i32, i32
  }
}

</mosaic_0001>

<llo_original>
// kernel: tpu_custom_call.1
$region0: #{tpu_custom_call.1}
  #allocation0 [shape = 'u32[]', space=smem, size = 0x4, offset = 0x4, fixed_abs, tag = 'smem constant byte address 0x4 - core index']
  #allocation1 [shape = 'u32[72,128]{1,0:T(1,128)}', space=vmem, size = 0x9000, scoped, tag = 'internal scratch']
  #allocation2 [shape = 'f32[16,1]{1,0:T(8,128)}', space=vmem, size = 0x2000, scoped, tag = 'scratch operand']
  #allocation3 [shape = 's32[16,1]{1,0:T(8,128)}', space=vmem, size = 0x2000, scoped, tag = 'scratch operand']
  %s0 = inlined_call_operand.vmem [shape: s32[16,1], index: 0, kind: input, shape index: {}]
  %s1 = inlined_call_operand.vmem [shape: f32[16,32], index: 1, kind: input, shape index: {}]
  %s2 = inlined_call_operand.hbm [shape: f32[8,128], index: 2, kind: output, shape index: {0}]
  %s3 = inlined_call_operand.hbm [shape: s32[8,128], index: 3, kind: output, shape index: {1}]
  %4 = xla_tuple %s2, %s3
  %s5 = sld [smem:[#allocation0]]
  $region34: #{tpu_custom_call.1} parent=0
    _
  %s7 = ssub.s32 1, %s5
  %s8 = scalar_select 0, %s7, %s5
  $region1: #{tpu_custom_call.1} parent=0
    #allocation4 [shape = 'u8[4096]{0}', space=vmem, size = 0x1000, scoped, tag = 'output window, operand 0, single buffered']
    #allocation5 [shape = 's32[1]{0}', space=sflag, size = 0x4, scoped, tag = 'scoped memory for tpu_custom_call.1']
    #allocation6 [shape = 'u8[4096]{0}', space=vmem, size = 0x1000, scoped, tag = 'output window, operand 1, single buffered']
    #allocation7 [shape = 's32[1]{0}', space=sflag, size = 0x4, scoped, tag = 'scoped memory for tpu_custom_call.1']
    %9 = vsyncpa [#allocation5], 0
    %10 = vsyncpa [#allocation7], 0
    // Predicated region
    $region2: #{tpu_custom_call.1} parent=1 // pred_check
      _
    $region3: #{tpu_custom_call.1} parent=1 // pred_check_branch
      %12 = sbr.rel (0) target = $region5
    $region4: #{tpu_custom_call.1} parent=1 // pred_region
      %s13 = sadd.s32 0, 0
      %s14 = smul.u32 2, %s13
      %p15 = scmp.lt.s32.totalorder %s14, 1
      %s16 = scalar_select %p15, %s14, 1
      %s17 = smul.addr %s16, 8
      %s18 = scalar_lea.vmem %s0, %s17
      %s19 = sadd.s32 0, 0
      %s20 = smul.u32 2, %s19
    $region5: #{tpu_custom_call.1} parent=1 // pred_fallthru
      _
    // Predicated region
    $region6: #{tpu_custom_call.1} parent=1 // pred_check
      _
    $region7: #{tpu_custom_call.1} parent=1 // pred_check_branch
      %22 = sbr.rel (0) target = $region9
    $region8: #{tpu_custom_call.1} parent=1 // pred_region
      %s23 = sadd.s32 0, 0
      %s24 = smul.u32 2, %s23
      %p25 = scmp.lt.s32.totalorder %s24, 1
      %s26 = scalar_select %p25, %s24, 1
      %s27 = smul.addr %s26, 8
      %s28 = scalar_lea.vmem %s1, %s27
      %s29 = sadd.s32 0, 0
      %s30 = smul.u32 2, %s29
    $region9: #{tpu_custom_call.1} parent=1 // pred_fallthru
      _
    %s31 = sadd.s32 0, 0
    %s32 = smul.u32 2, %s31
    %p33 = scmp.lt.s32.totalorder %s32, 1
    %s34 = scalar_select %p33, %s32, 1
    %s35 = smul.addr %s34, 8
    %s36 = scalar_lea.vmem %s0, %s35
    %s37 = sadd.s32 0, 0
    %s38 = smul.u32 2, %s37
    %p39 = scmp.lt.s32.totalorder %s38, 1
    %s40 = scalar_select %p39, %s38, 1
    %s41 = smul.addr %s40, 8
    %s42 = scalar_lea.vmem %s1, %s41
    %s43 = sadd.s32 0, 0
    %s44 = smul.u32 2, %s43
    %p45 = scmp.lt.s32.totalorder %s44, 1
    %s46 = scalar_select %p45, %s44, 1
    %s47 = smul.addr %s46, 8
    %s48 = scalar_lea.vmem %s0, %s47
    %s49 = sadd.s32 0, 0
    %s50 = smul.u32 2, %s49
    %s51 = sadd.s32 0, 0
    %s52 = smul.u32 2, %s51
    %p53 = scmp.lt.s32.totalorder %s52, 1
    %s54 = scalar_select %p53, %s52, 1
    %s55 = smul.addr %s54, 8
    %s56 = scalar_lea.vmem %s1, %s55
    %s57 = sadd.s32 0, 0
    %s58 = smul.u32 2, %s57
    %p59 = scmp.eq.s32.totalorder 0, 0
    // Predicated region
    $region10: #{tpu_custom_call.1} parent=1 // pred_check
      %p60 = pneg %p59
    $region11: #{tpu_custom_call.1} parent=1 // pred_check_branch
      %62 = sbr.rel (%p60) target = $region13
    $region12: #{tpu_custom_call.1} parent=1 // pred_region
      %vm63 = vcmask 7168
      %64 = vst.msk [vmem:[#allocation2] sm:$0xff] %vm63, 0.0
      %65 = vst.msk [vmem:[#allocation2 + $0x8] sm:$0xff] %vm63, 0.0
      %66 = vst.msk [vmem:[#allocation3] sm:$0xff] %vm63, 0
      %67 = vst.msk [vmem:[#allocation3 + $0x8] sm:$0xff] %vm63, 0
    $region13: #{tpu_custom_call.1} parent=1 // pred_fallthru
      _
    %v68 = vld [vmem:[%s48] sm:$0xff]
    %v69 = vld [vmem:[%s48 + $0x8] sm:$0xff]
    %v70 = vld [vmem:[%s56] sm:$0xff]
    %v71 = vld [vmem:[%s56 + $0x8] sm:$0xff]
    %vm72 = vcmask 261120
    %v73 = vsel %vm72, %v70, -inf
    %74 = vmax.xlane.f32.xlu0 %v73
    %v75 = vpop.xlane.xlu0 %74
    %v76 = vsel %vm72, %v71, -inf
    %77 = vmax.xlane.f32.xlu0 %v76
    %v78 = vpop.xlane.xlu0 %77
    %v79 = vsub.f32 %v70, %v75
    %v80 = vsub.f32 %v71, %v78
    %v81 = vmul.f32 %v79, 1.442695
    %v82 = vpow.pop %v81
    %v83 = vmul.f32 %v80, 1.442695
    %v84 = vpow.pop %v83
    %v85 = vsel %vm72, %v82, 0.0
    %86 = vadd.xlane.f32.xlu0 %v85
    %v87 = vpop.xlane.xlu0 %86
    %v88 = vsel %vm72, %v84, 0.0
    %89 = vadd.xlane.f32.xlu0 %v88
    %v90 = vpop.xlane.xlu0 %89
    %v91 = vlog2.pop %v87
    %v92 = vmul.f32 %v91, 0.6931472
    %v93 = vlog2.pop %v90
    %v94 = vmul.f32 %v93, 0.6931472
    %v95 = vadd.f32 %v92, %v75
    %v96 = vadd.f32 %v94, %v78
    %v97 = vsel %vm72, %v70, 0.0
    %98 = vadd.xlane.f32.xlu0 %v97
    %v99 = vpop.xlane.xlu0 %98
    %v100 = vsel %vm72, %v71, 0.0
    %101 = vadd.xlane.f32.xlu0 %v100
    %v102 = vpop.xlane.xlu0 %101
    %v103 = vlaneseq
    %v104 = vand.u32 %v103, 127
    %105 = vset.pattern.permute.xlu0 0
    %106 = vperm.xlu0 %105, %v68
    %v107 = vpop.permute.xlu0 %106
    %108 = vset.pattern.permute.xlu0 0
    %109 = vperm.xlu0 %108, %v69
    %v110 = vpop.permute.xlu0 %109
    %vm111 = vcmp.eq.s32.totalorder %v104, %v107
    %vm112 = vcmp.eq.s32.totalorder %v104, %v110
    %v113 = vsel %vm111, %v70, 0.0
    %v114 = vsel %vm112, %v71, 0.0
    %v115 = vsel %vm72, %v113, 0.0
    %116 = vadd.xlane.f32.xlu0 %v115
    %v117 = vpop.xlane.xlu0 %116
    %v118 = vsel %vm72, %v114, 0.0
    %119 = vadd.xlane.f32.xlu0 %v118
    %v120 = vpop.xlane.xlu0 %119
    %v121 = vmul.f32 %v99, 0.0033333334
    %v122 = vmul.f32 %v102, 0.0033333334
    %v123 = vmul.f32 %v117, 0.89666665
    %v124 = vmul.f32 %v120, 0.89666665
    %v125 = vadd.f32 %v121, %v123
    %v126 = vadd.f32 %v122, %v124
    %v127 = vmul.f32 %v70, 0.0033333334
    %v128 = vmul.f32 %v71, 0.0033333334
    %v129 = vsub.f32 %v125, %v127
    %v130 = vsub.f32 %v126, %v128
    %v131 = vadd.f32 %v95, -0.66520274
    %v132 = vadd.f32 %v96, -0.66520274
    %v133 = vsub.f32 %v131, %v129
    %v134 = vsub.f32 %v132, %v130
    %vm135 = vcmp.ne.s32.totalorder %v68, 0
    %vm136 = vcmp.ne.s32.totalorder %v69, 0
    %v137 = vld [vmem:[#allocation2] sm:$0xff]
    %v138 = vld [vmem:[#allocation2 + $0x8] sm:$0xff]
    %v139 = vsel %vm135, %v133, 0.0
    %v140 = vsel %vm136, %v134, 0.0
    %v141 = vadd.f32 %v137, %v139
    %v142 = vadd.f32 %v138, %v140
    %vm143 = vcmask 7168
    %144 = vst.msk [vmem:[#allocation2] sm:$0xff] %vm143, %v141
    %145 = vst.msk [vmem:[#allocation2 + $0x8] sm:$0xff] %vm143, %v142
    %v146 = vld [vmem:[#allocation3] sm:$0xff]
    %v147 = vld [vmem:[#allocation3 + $0x8] sm:$0xff]
    %v148 = vsel %vm135, 1, 0
    %v149 = vsel %vm136, 1, 0
    %v150 = vadd.s32 %v146, %v148
    %v151 = vadd.s32 %v147, %v149
    %152 = vst.msk [vmem:[#allocation3] sm:$0xff] %vm143, %v150
    %153 = vst.msk [vmem:[#allocation3 + $0x8] sm:$0xff] %vm143, %v151
    // Predicated region
    $region14: #{tpu_custom_call.1} parent=1 // pred_check
      %p154 = pneg %p59
    $region15: #{tpu_custom_call.1} parent=1 // pred_check_branch
      %156 = sbr.rel (%p154) target = $region17
    $region16: #{tpu_custom_call.1} parent=1 // pred_region
      %v157 = vld [vmem:[#allocation2] sm:$0xff]
      %v158 = vld [vmem:[#allocation2 + $0x8] sm:$0xff]
      %v159 = vsel %vm143, %v157, 0.0
      %v160 = vsel %vm143, %v158, 0.0
      %v161 = vadd.f32 %v159, %v160
      %162 = vadd.xlane.f32.xlu0 %v161
      %v163 = vpop.xlane.xlu0 %162
      %v164 = vrot.slane %v163, 4
      %v165 = vadd.f32 %v163, %v164
      %v166 = vrot.slane %v165, 2
      %v167 = vadd.f32 %v165, %v166
      %v168 = vrot.slane %v167, 1
      %v169 = vadd.f32 %v167, %v168
      %s170 = vtos %v169
      %v171 = vstv %s170
      %v172 = vadd.f32 %v171, 0.0
      %173 = vst [vmem:[#allocation4] sm:$0xff] %v172
      %v174 = vld [vmem:[#allocation3] sm:$0xff]
      %v175 = vld [vmem:[#allocation3 + $0x8] sm:$0xff]
      %v176 = vsel %vm143, %v174, 0
      %v177 = vsel %vm143, %v175, 0
      %v178 = vadd.s32 %v176, %v177
      %v179 = vand.u32 %v178, 65535
      %v180 = vshrl.u32 %v178, 16
      %v181 = vcvt.s32.f32 %v179
      %v182 = vcvt.s32.f32 %v180
      %183 = vadd.xlane.f32.xlu0 %v181
      %v184 = vpop.xlane.xlu0 %183
      %185 = vadd.xlane.f32.xlu0 %v182
      %v186 = vpop.xlane.xlu0 %185
      %v187 = vcvt.f32.s32 %v184
      %v188 = vcvt.f32.s32 %v186
      %v189 = vshll.u32 %v188, 16
      %v190 = vadd.s32 %v189, %v187
      %v191 = vrot.slane %v190, 4
      %v192 = vadd.s32 %v190, %v191
      %v193 = vrot.slane %v192, 2
      %v194 = vadd.s32 %v192, %v193
      %v195 = vrot.slane %v194, 1
      %v196 = vadd.s32 %v194, %v195
      %s197 = vtos %v196
      %v198 = vstv %s197
      %199 = vst [vmem:[#allocation6] sm:$0xff] %v198
    $region17: #{tpu_custom_call.1} parent=1 // pred_fallthru
      _
    // Predicated region
    $region18: #{tpu_custom_call.1} parent=1 // pred_check
      _
    $region19: #{tpu_custom_call.1} parent=1 // pred_check_branch
      %201 = sbr.rel (0) target = $region21
    $region20: #{tpu_custom_call.1} parent=1 // pred_region
      %203 = vsyncadd [#allocation5], 0
      %s205 = sshll.u32 [#allocation4], 4
      %s206 = int_to_ptr.vmem [resolvable:$true] %s205
      %s207 = sshll.u32 %s2, 4
      %s208 = int_to_ptr.hbm [resolvable:$true] %s207
      %210 = dma.vmem_to_hbm [thread:$0]  %s206, 128, %s208, [#allocation5]
    $region21: #{tpu_custom_call.1} parent=1 // pred_fallthru
      _
    // Predicated region
    $region22: #{tpu_custom_call.1} parent=1 // pred_check
      _
    $region23: #{tpu_custom_call.1} parent=1 // pred_check_branch
      %212 = sbr.rel (0) target = $region25
    $region24: #{tpu_custom_call.1} parent=1 // pred_region
      %214 = vsyncadd [#allocation7], 0
      %s216 = sshll.u32 [#allocation6], 4
      %s217 = int_to_ptr.vmem [resolvable:$true] %s216
      %s218 = sshll.u32 %s3, 4
      %s219 = int_to_ptr.hbm [resolvable:$true] %s218
      %221 = dma.vmem_to_hbm [thread:$0]  %s217, 128, %s219, [#allocation7]
    $region25: #{tpu_custom_call.1} parent=1 // pred_fallthru
      _
    // Predicated region
    $region26: #{tpu_custom_call.1} parent=1 // pred_check
      _
    $region27: #{tpu_custom_call.1} parent=1 // pred_check_branch
      %223 = sbr.rel (0) target = $region29
    $region28: #{tpu_custom_call.1} parent=1 // pred_region
      %225 = dma.done [#allocation5], 128
    $region29: #{tpu_custom_call.1} parent=1 // pred_fallthru
      _
    // Predicated region
    $region30: #{tpu_custom_call.1} parent=1 // pred_check
      _
    $region31: #{tpu_custom_call.1} parent=1 // pred_check_branch
      %227 = sbr.rel (0) target = $region33
    $region32: #{tpu_custom_call.1} parent=1 // pred_region
      %229 = dma.done [#allocation7], 128
    $region33: #{tpu_custom_call.1} parent=1 // pred_fallthru
      _
    %230 = vsyncpa [#allocation5], 1
    %231 = vsyncpa [#allocation7], 1

</llo_original>
